<compile_context>
chip_gen: v5e
topology: v5e:2x2
jax: 0.10.0
libtpu: 0.0.40
codegen_flags: <defaults>
</compile_context>

<pallas_src>
import jax
import jax.numpy as jnp
from jax import lax
from jax.experimental import pallas as pl
from jax.experimental.pallas import tpu as pltpu


def _lstm_decoder_kernel(x_ref, w_rec_ref, w_head_ref, out_ref):
    # Static shape bookkeeping (all derived from ref shapes).
    B = out_ref.shape[0]
    TB, I = x_ref.shape
    T = TB // B
    H4 = w_rec_ref.shape[1]
    H = H4 // 4
    TH = T * H

    # ---- Static views into the packed weight slabs (free). ---------------------
    w_ih = w_rec_ref[0:I, :]                       # (I, 4H)  (i/f/o cols pre-scaled x0.5)
    w_hh = w_rec_ref[I:I + H, :]                   # (H, 4H)  (i/f/o cols pre-scaled x0.5)
    b = w_rec_ref[I + H:I + H + 1, :]              # (1, 4H)

    # ---- Hoisted input projection, t-major rows (row = t*B + b). ---------------
    gates_x = jnp.dot(x_ref[...], w_ih, preferred_element_type=jnp.float32) + b   # (T*B, 4H)

    h = jnp.zeros((B, H), jnp.float32)
    c = jnp.zeros((B, H), jnp.float32)
    hs = []

    # ---- Fully unrolled recurrence (T small & static); h/c stay in registers. --
    for t in range(T):
        gates = gates_x[t * B:(t + 1) * B, :] + jnp.dot(
            h, w_hh, preferred_element_type=jnp.float32)           # (B, 4H)
        # i/f/o gate columns were pre-scaled by 0.5 host-side so that
        # sigmoid(x) = 0.5*tanh(x/2) + 0.5 needs only ONE tanh over the whole
        # 128-lane gates vreg; the g-gate lanes already hold plain tanh(gates).
        th = jnp.tanh(gates)
        sg = 0.5 * th + 0.5                                         # scalar FMA (VPU)
        i_g = sg[:, 0 * H:1 * H]
        f_g = sg[:, 1 * H:2 * H]
        g_g = th[:, 2 * H:3 * H]
        o_g = sg[:, 3 * H:4 * H]
        c = f_g * c + i_g * g_g
        h = o_g * jnp.tanh(c)                                       # 2nd (and last) EUP push
        hs.append(h)

    # ---- Deferred output head: one MXU call against the block-diagonal W_out. --
    h_all = jnp.concatenate(hs, axis=1)                             # (B, T*H)
    w_out_bd = w_head_ref[0:TH, :]                                  # (T*H, T*V) block-diag
    b_out = w_head_ref[TH:TH + 1, :]                                # (1, T*V)   tiled bias
    out_ref[...] = jnp.dot(h_all, w_out_bd,
                           preferred_element_type=jnp.float32) + b_out   # (B, T*V) dense store


def pack_params(params, T):
    """Host-side packing: pre-scale sigmoid-gate columns, build block-diag head,
    and concatenate into two row-padded VMEM slabs (2 weight DMAs total)."""
    w_ih, w_hh, b, w_out, b_out = (params["w_ih"], params["w_hh"], params["b"],
                                   params["w_out"], params["b_out"])
    I, H4 = w_ih.shape
    H = w_hh.shape[0]
    V = w_out.shape[1]
    assert H4 == 4 * H and b.shape == (1, 4 * H) and b_out.shape == (1, V)

    # Pre-scale i/f/o gate columns by 0.5 (exact in f32) for sigmoid-via-tanh.
    gate_scale = jnp.concatenate([jnp.full((H,), 0.5), jnp.full((H,), 0.5),
                                  jnp.ones((H,)), jnp.full((H,), 0.5)]).astype(jnp.float32)
    w_ih_s = (w_ih * gate_scale[None, :]).astype(jnp.float32)
    w_hh_s = (w_hh * gate_scale[None, :]).astype(jnp.float32)
    b_s = (b * gate_scale[None, :]).astype(jnp.float32)

    rec_rows = I + H + 1
    rec_pad = (-rec_rows) % 8
    w_rec = jnp.concatenate(
        [w_ih_s, w_hh_s, b_s, jnp.zeros((rec_pad, 4 * H), jnp.float32)], axis=0)

    # Block-diagonal head weight -> lane-dense (B, T*V) output in one matmul.
    w_out_bd = jnp.kron(jnp.eye(T, dtype=jnp.float32), w_out.astype(jnp.float32))  # (T*H, T*V)
    b_out_t = jnp.tile(b_out.astype(jnp.float32), (1, T))                           # (1, T*V)
    head_rows = T * H + 1
    head_pad = (-head_rows) % 8
    w_head = jnp.concatenate(
        [w_out_bd, b_out_t, jnp.zeros((head_pad, T * V), jnp.float32)], axis=0)

    return {"w_rec": w_rec, "w_head": w_head, "I": I, "H": H, "V": V}


def visual_lstm_decoder(images, packed):
    """images: (B, T, INPUT_SIZE) float32 (batch_first=True).

    Returns (outputs (B, T, VOCAB), lengths (B,)) like VisualLSTMDecoder.forward.
    """
    B, T, I = images.shape
    assert I == packed["I"]
    V = packed["V"]
    # TODO(synk): NUM_LAYERS>1 / bidirectional LSTM variants are not implemented
    #             (this kernel covers the single-layer unidirectional config).

    # t-major flatten (row = t*B + b) so per-step gate reads are contiguous sublanes.
    x_tm = jnp.transpose(images.astype(jnp.float32), (1, 0, 2)).reshape(T * B, I)

    vmem = pl.BlockSpec(memory_space=pltpu.MemorySpace.VMEM)
    out_flat = pl.pallas_call(
        _lstm_decoder_kernel,
        out_shape=jax.ShapeDtypeStruct((B, T * V), jnp.float32),
        in_specs=[vmem, vmem, vmem],
        out_specs=vmem,
    )(x_tm, packed["w_rec"], packed["w_head"])

    outputs = out_flat.reshape(B, T, V)                 # free reshape, batch-first
    lengths = jnp.full((B,), T, dtype=jnp.int32)        # torch.long -> int32 on TPU
    return outputs, lengths


def _reference(images, params):
    """Pure-JAX reference (lax.scan) of the same LSTM + Linear forward."""
    w_ih, w_hh, b, w_out, b_out = (params["w_ih"], params["w_hh"], params["b"],
                                   params["w_out"], params["b_out"])
    B, T, I = images.shape
    H = w_hh.shape[0]
    x_tm = jnp.transpose(images, (1, 0, 2)).astype(jnp.float32)

    def step(carry, x_t):
        h, c = carry
        gates = x_t @ w_ih + h @ w_hh + b[0]
        i_g = jax.nn.sigmoid(gates[:, 0 * H:1 * H])
        f_g = jax.nn.sigmoid(gates[:, 1 * H:2 * H])
        g_g = jnp.tanh(gates[:, 2 * H:3 * H])
        o_g = jax.nn.sigmoid(gates[:, 3 * H:4 * H])
        c_new = f_g * c + i_g * g_g
        h_new = o_g * jnp.tanh(c_new)
        return (h_new, c_new), h_new @ w_out + b_out[0]

    init = (jnp.zeros((B, H), jnp.float32), jnp.zeros((B, H), jnp.float32))
    _, outs = lax.scan(step, init, x_tm)
    return jnp.transpose(outs, (1, 0, 2))


def make_params(key, input_size, hidden_size, vocab_size):
    """Deterministic synthetic parameters (PyTorch-style uniform(-1/sqrt(H), 1/sqrt(H)))."""
    ks = jax.random.split(key, 6)
    bound = 1.0 / jnp.sqrt(jnp.float32(hidden_size))
    u = lambda k, shape: jax.random.uniform(k, shape, jnp.float32, -bound, bound)
    w_ih = u(ks[0], (input_size, 4 * hidden_size))       # (I, 4H)  (pre-transposed)
    w_hh = u(ks[1], (hidden_size, 4 * hidden_size))      # (H, 4H)
    b = u(ks[2], (1, 4 * hidden_size)) + u(ks[3], (1, 4 * hidden_size))   # b_ih + b_hh
    w_out = u(ks[4], (hidden_size, vocab_size))          # (H, V)
    b_out = u(ks[5], (1, vocab_size))                    # (1, V)
    return {"w_ih": w_ih, "w_hh": w_hh, "b": b, "w_out": w_out, "b_out": b_out}


if __name__ == "__main__":
    # cfg.MODEL.DECODER.{INPUT_SIZE=32, HIDDEN_SIZE=32, NUM_LAYERS=1, BIAS=True,
    #                    BATCH_FIRST=True, DROPOUT=0.0, BIDIRECTIONAL=False,
    #                    VOCAB_SIZE=16, OUT_BIAS=True}
    B, T, INPUT_SIZE, HIDDEN_SIZE, VOCAB_SIZE = 2, 8, 32, 32, 16
    # Lane-dense layout assumptions of this kernel instance (see review note):
    assert 4 * HIDDEN_SIZE == 128 and T * VOCAB_SIZE == 128

    key = jax.random.PRNGKey(0)
    k_img, k_par = jax.random.split(key)
    images = jax.random.normal(k_img, (B, T, INPUT_SIZE), jnp.float32)
    params = make_params(k_par, INPUT_SIZE, HIDDEN_SIZE, VOCAB_SIZE)
    packed = pack_params(params, T)

    outputs, lengths = visual_lstm_decoder(images, packed)
    outputs = jax.block_until_ready(outputs)
    lengths = jax.block_until_ready(lengths)

    ref = _reference(images, params)
    assert outputs.shape == (B, T, VOCAB_SIZE)
    assert lengths.shape == (B,) and bool(jnp.all(lengths == T))
    assert jnp.allclose(outputs, ref, atol=2e-4, rtol=1e-4), (
        float(jnp.max(jnp.abs(outputs - ref))))

    print("KERNEL_OK")
</pallas_src>

<mosaic_0001>
module attributes {stable_mosaic.version = 11 : i64} {
  func.func @_lstm_decoder_kernel(%arg0: memref<16x32xf32, #tpu.memory_space<vmem>>, %arg1: memref<72x128xf32, #tpu.memory_space<vmem>>, %arg2: memref<264x128xf32, #tpu.memory_space<vmem>>, %arg3: memref<2x128xf32, #tpu.memory_space<vmem>>) attributes {dimension_semantics = [], scalar_prefetch = 0 : i64, scratch_operands = 0 : i64, tpu.core_type = #tpu.core_type<tc>} {
    %c0 = arith.constant 0 : index
    %c0_0 = arith.constant 0 : index
    %0 = vector.load %arg1[%c0, %c0_0] : memref<72x128xf32, #tpu.memory_space<vmem>>, vector<32x128xf32>
    %c32 = arith.constant 32 : index
    %c0_1 = arith.constant 0 : index
    %1 = vector.load %arg1[%c32, %c0_1] : memref<72x128xf32, #tpu.memory_space<vmem>>, vector<32x128xf32>
    %c64 = arith.constant 64 : index
    %c0_2 = arith.constant 0 : index
    %2 = vector.load %arg1[%c64, %c0_2] : memref<72x128xf32, #tpu.memory_space<vmem>>, vector<1x128xf32>
    %c0_3 = arith.constant 0 : index
    %c0_4 = arith.constant 0 : index
    %3 = vector.load %arg0[%c0_3, %c0_4] : memref<16x32xf32, #tpu.memory_space<vmem>>, vector<16x32xf32>
    %cst = arith.constant dense<0.000000e+00> : vector<16x128xf32>
    %4 = tpu.matmul %3, %0, %cst {dimension_numbers = #tpu.dot_dimension_numbers<[1], [0], [0], [1], [0, 0, 1, 1], [], []>} : vector<16x32xf32>, vector<32x128xf32>, vector<16x128xf32> -> vector<16x128xf32>
    %5 = vector.broadcast %2 : vector<1x128xf32> to vector<16x128xf32>
    %6 = arith.addf %4, %5 : vector<16x128xf32>
    %cst_5 = arith.constant 0.000000e+00 : f32
    %7 = vector.broadcast %cst_5 : f32 to vector<2x32xf32>
    %cst_6 = arith.constant 0.000000e+00 : f32
    %8 = vector.broadcast %cst_6 : f32 to vector<2x32xf32>
    %9 = vector.extract_strided_slice %6 {offsets = [0, 0], sizes = [2, 128], strides = [1, 1]} : vector<16x128xf32> to vector<2x128xf32>
    %cst_7 = arith.constant dense<0.000000e+00> : vector<2x128xf32>
    %10 = tpu.matmul %7, %1, %cst_7 {dimension_numbers = #tpu.dot_dimension_numbers<[1], [0], [0], [1], [0, 0, 1, 1], [], []>} : vector<2x32xf32>, vector<32x128xf32>, vector<2x128xf32> -> vector<2x128xf32>
    %11 = arith.addf %9, %10 : vector<2x128xf32>
    %12 = math.tanh %11 : vector<2x128xf32>
    %cst_8 = arith.constant 5.000000e-01 : f32
    %13 = vector.broadcast %cst_8 : f32 to vector<2x128xf32>
    %14 = arith.mulf %13, %12 : vector<2x128xf32>
    %cst_9 = arith.constant 5.000000e-01 : f32
    %15 = vector.broadcast %cst_9 : f32 to vector<2x128xf32>
    %16 = arith.addf %14, %15 : vector<2x128xf32>
    %17 = vector.extract_strided_slice %16 {offsets = [0, 0], sizes = [2, 32], strides = [1, 1]} : vector<2x128xf32> to vector<2x32xf32>
    %18 = vector.extract_strided_slice %16 {offsets = [0, 32], sizes = [2, 32], strides = [1, 1]} : vector<2x128xf32> to vector<2x32xf32>
    %19 = vector.extract_strided_slice %12 {offsets = [0, 64], sizes = [2, 32], strides = [1, 1]} : vector<2x128xf32> to vector<2x32xf32>
    %20 = vector.extract_strided_slice %16 {offsets = [0, 96], sizes = [2, 32], strides = [1, 1]} : vector<2x128xf32> to vector<2x32xf32>
    %21 = arith.mulf %18, %8 : vector<2x32xf32>
    %22 = arith.mulf %17, %19 : vector<2x32xf32>
    %23 = arith.addf %21, %22 : vector<2x32xf32>
    %24 = math.tanh %23 : vector<2x32xf32>
    %25 = arith.mulf %20, %24 : vector<2x32xf32>
    %26 = vector.extract_strided_slice %6 {offsets = [2, 0], sizes = [2, 128], strides = [1, 1]} : vector<16x128xf32> to vector<2x128xf32>
    %cst_10 = arith.constant dense<0.000000e+00> : vector<2x128xf32>
    %27 = tpu.matmul %25, %1, %cst_10 {dimension_numbers = #tpu.dot_dimension_numbers<[1], [0], [0], [1], [0, 0, 1, 1], [], []>} : vector<2x32xf32>, vector<32x128xf32>, vector<2x128xf32> -> vector<2x128xf32>
    %28 = arith.addf %26, %27 : vector<2x128xf32>
    %29 = math.tanh %28 : vector<2x128xf32>
    %cst_11 = arith.constant 5.000000e-01 : f32
    %30 = vector.broadcast %cst_11 : f32 to vector<2x128xf32>
    %31 = arith.mulf %30, %29 : vector<2x128xf32>
    %cst_12 = arith.constant 5.000000e-01 : f32
    %32 = vector.broadcast %cst_12 : f32 to vector<2x128xf32>
    %33 = arith.addf %31, %32 : vector<2x128xf32>
    %34 = vector.extract_strided_slice %33 {offsets = [0, 0], sizes = [2, 32], strides = [1, 1]} : vector<2x128xf32> to vector<2x32xf32>
    %35 = vector.extract_strided_slice %33 {offsets = [0, 32], sizes = [2, 32], strides = [1, 1]} : vector<2x128xf32> to vector<2x32xf32>
    %36 = vector.extract_strided_slice %29 {offsets = [0, 64], sizes = [2, 32], strides = [1, 1]} : vector<2x128xf32> to vector<2x32xf32>
    %37 = vector.extract_strided_slice %33 {offsets = [0, 96], sizes = [2, 32], strides = [1, 1]} : vector<2x128xf32> to vector<2x32xf32>
    %38 = arith.mulf %35, %23 : vector<2x32xf32>
    %39 = arith.mulf %34, %36 : vector<2x32xf32>
    %40 = arith.addf %38, %39 : vector<2x32xf32>
    %41 = math.tanh %40 : vector<2x32xf32>
    %42 = arith.mulf %37, %41 : vector<2x32xf32>
    %43 = vector.extract_strided_slice %6 {offsets = [4, 0], sizes = [2, 128], strides = [1, 1]} : vector<16x128xf32> to vector<2x128xf32>
    %cst_13 = arith.constant dense<0.000000e+00> : vector<2x128xf32>
    %44 = tpu.matmul %42, %1, %cst_13 {dimension_numbers = #tpu.dot_dimension_numbers<[1], [0], [0], [1], [0, 0, 1, 1], [], []>} : vector<2x32xf32>, vector<32x128xf32>, vector<2x128xf32> -> vector<2x128xf32>
    %45 = arith.addf %43, %44 : vector<2x128xf32>
    %46 = math.tanh %45 : vector<2x128xf32>
    %cst_14 = arith.constant 5.000000e-01 : f32
    %47 = vector.broadcast %cst_14 : f32 to vector<2x128xf32>
    %48 = arith.mulf %47, %46 : vector<2x128xf32>
    %cst_15 = arith.constant 5.000000e-01 : f32
    %49 = vector.broadcast %cst_15 : f32 to vector<2x128xf32>
    %50 = arith.addf %48, %49 : vector<2x128xf32>
    %51 = vector.extract_strided_slice %50 {offsets = [0, 0], sizes = [2, 32], strides = [1, 1]} : vector<2x128xf32> to vector<2x32xf32>
    %52 = vector.extract_strided_slice %50 {offsets = [0, 32], sizes = [2, 32], strides = [1, 1]} : vector<2x128xf32> to vector<2x32xf32>
    %53 = vector.extract_strided_slice %46 {offsets = [0, 64], sizes = [2, 32], strides = [1, 1]} : vector<2x128xf32> to vector<2x32xf32>
    %54 = vector.extract_strided_slice %50 {offsets = [0, 96], sizes = [2, 32], strides = [1, 1]} : vector<2x128xf32> to vector<2x32xf32>
    %55 = arith.mulf %52, %40 : vector<2x32xf32>
    %56 = arith.mulf %51, %53 : vector<2x32xf32>
    %57 = arith.addf %55, %56 : vector<2x32xf32>
    %58 = math.tanh %57 : vector<2x32xf32>
    %59 = arith.mulf %54, %58 : vector<2x32xf32>
    %60 = vector.extract_strided_slice %6 {offsets = [6, 0], sizes = [2, 128], strides = [1, 1]} : vector<16x128xf32> to vector<2x128xf32>
    %cst_16 = arith.constant dense<0.000000e+00> : vector<2x128xf32>
    %61 = tpu.matmul %59, %1, %cst_16 {dimension_numbers = #tpu.dot_dimension_numbers<[1], [0], [0], [1], [0, 0, 1, 1], [], []>} : vector<2x32xf32>, vector<32x128xf32>, vector<2x128xf32> -> vector<2x128xf32>
    %62 = arith.addf %60, %61 : vector<2x128xf32>
    %63 = math.tanh %62 : vector<2x128xf32>
    %cst_17 = arith.constant 5.000000e-01 : f32
    %64 = vector.broadcast %cst_17 : f32 to vector<2x128xf32>
    %65 = arith.mulf %64, %63 : vector<2x128xf32>
    %cst_18 = arith.constant 5.000000e-01 : f32
    %66 = vector.broadcast %cst_18 : f32 to vector<2x128xf32>
    %67 = arith.addf %65, %66 : vector<2x128xf32>
    %68 = vector.extract_strided_slice %67 {offsets = [0, 0], sizes = [2, 32], strides = [1, 1]} : vector<2x128xf32> to vector<2x32xf32>
    %69 = vector.extract_strided_slice %67 {offsets = [0, 32], sizes = [2, 32], strides = [1, 1]} : vector<2x128xf32> to vector<2x32xf32>
    %70 = vector.extract_strided_slice %63 {offsets = [0, 64], sizes = [2, 32], strides = [1, 1]} : vector<2x128xf32> to vector<2x32xf32>
    %71 = vector.extract_strided_slice %67 {offsets = [0, 96], sizes = [2, 32], strides = [1, 1]} : vector<2x128xf32> to vector<2x32xf32>
    %72 = arith.mulf %69, %57 : vector<2x32xf32>
    %73 = arith.mulf %68, %70 : vector<2x32xf32>
    %74 = arith.addf %72, %73 : vector<2x32xf32>
    %75 = math.tanh %74 : vector<2x32xf32>
    %76 = arith.mulf %71, %75 : vector<2x32xf32>
    %77 = vector.extract_strided_slice %6 {offsets = [8, 0], sizes = [2, 128], strides = [1, 1]} : vector<16x128xf32> to vector<2x128xf32>
    %cst_19 = arith.constant dense<0.000000e+00> : vector<2x128xf32>
    %78 = tpu.matmul %76, %1, %cst_19 {dimension_numbers = #tpu.dot_dimension_numbers<[1], [0], [0], [1], [0, 0, 1, 1], [], []>} : vector<2x32xf32>, vector<32x128xf32>, vector<2x128xf32> -> vector<2x128xf32>
    %79 = arith.addf %77, %78 : vector<2x128xf32>
    %80 = math.tanh %79 : vector<2x128xf32>
    %cst_20 = arith.constant 5.000000e-01 : f32
    %81 = vector.broadcast %cst_20 : f32 to vector<2x128xf32>
    %82 = arith.mulf %81, %80 : vector<2x128xf32>
    %cst_21 = arith.constant 5.000000e-01 : f32
    %83 = vector.broadcast %cst_21 : f32 to vector<2x128xf32>
    %84 = arith.addf %82, %83 : vector<2x128xf32>
    %85 = vector.extract_strided_slice %84 {offsets = [0, 0], sizes = [2, 32], strides = [1, 1]} : vector<2x128xf32> to vector<2x32xf32>
    %86 = vector.extract_strided_slice %84 {offsets = [0, 32], sizes = [2, 32], strides = [1, 1]} : vector<2x128xf32> to vector<2x32xf32>
    %87 = vector.extract_strided_slice %80 {offsets = [0, 64], sizes = [2, 32], strides = [1, 1]} : vector<2x128xf32> to vector<2x32xf32>
    %88 = vector.extract_strided_slice %84 {offsets = [0, 96], sizes = [2, 32], strides = [1, 1]} : vector<2x128xf32> to vector<2x32xf32>
    %89 = arith.mulf %86, %74 : vector<2x32xf32>
    %90 = arith.mulf %85, %87 : vector<2x32xf32>
    %91 = arith.addf %89, %90 : vector<2x32xf32>
    %92 = math.tanh %91 : vector<2x32xf32>
    %93 = arith.mulf %88, %92 : vector<2x32xf32>
    %94 = vector.extract_strided_slice %6 {offsets = [10, 0], sizes = [2, 128], strides = [1, 1]} : vector<16x128xf32> to vector<2x128xf32>
    %cst_22 = arith.constant dense<0.000000e+00> : vector<2x128xf32>
    %95 = tpu.matmul %93, %1, %cst_22 {dimension_numbers = #tpu.dot_dimension_numbers<[1], [0], [0], [1], [0, 0, 1, 1], [], []>} : vector<2x32xf32>, vector<32x128xf32>, vector<2x128xf32> -> vector<2x128xf32>
    %96 = arith.addf %94, %95 : vector<2x128xf32>
    %97 = math.tanh %96 : vector<2x128xf32>
    %cst_23 = arith.constant 5.000000e-01 : f32
    %98 = vector.broadcast %cst_23 : f32 to vector<2x128xf32>
    %99 = arith.mulf %98, %97 : vector<2x128xf32>
    %cst_24 = arith.constant 5.000000e-01 : f32
    %100 = vector.broadcast %cst_24 : f32 to vector<2x128xf32>
    %101 = arith.addf %99, %100 : vector<2x128xf32>
    %102 = vector.extract_strided_slice %101 {offsets = [0, 0], sizes = [2, 32], strides = [1, 1]} : vector<2x128xf32> to vector<2x32xf32>
    %103 = vector.extract_strided_slice %101 {offsets = [0, 32], sizes = [2, 32], strides = [1, 1]} : vector<2x128xf32> to vector<2x32xf32>
    %104 = vector.extract_strided_slice %97 {offsets = [0, 64], sizes = [2, 32], strides = [1, 1]} : vector<2x128xf32> to vector<2x32xf32>
    %105 = vector.extract_strided_slice %101 {offsets = [0, 96], sizes = [2, 32], strides = [1, 1]} : vector<2x128xf32> to vector<2x32xf32>
    %106 = arith.mulf %103, %91 : vector<2x32xf32>
    %107 = arith.mulf %102, %104 : vector<2x32xf32>
    %108 = arith.addf %106, %107 : vector<2x32xf32>
    %109 = math.tanh %108 : vector<2x32xf32>
    %110 = arith.mulf %105, %109 : vector<2x32xf32>
    %111 = vector.extract_strided_slice %6 {offsets = [12, 0], sizes = [2, 128], strides = [1, 1]} : vector<16x128xf32> to vector<2x128xf32>
    %cst_25 = arith.constant dense<0.000000e+00> : vector<2x128xf32>
    %112 = tpu.matmul %110, %1, %cst_25 {dimension_numbers = #tpu.dot_dimension_numbers<[1], [0], [0], [1], [0, 0, 1, 1], [], []>} : vector<2x32xf32>, vector<32x128xf32>, vector<2x128xf32> -> vector<2x128xf32>
    %113 = arith.addf %111, %112 : vector<2x128xf32>
    %114 = math.tanh %113 : vector<2x128xf32>
    %cst_26 = arith.constant 5.000000e-01 : f32
    %115 = vector.broadcast %cst_26 : f32 to vector<2x128xf32>
    %116 = arith.mulf %115, %114 : vector<2x128xf32>
    %cst_27 = arith.constant 5.000000e-01 : f32
    %117 = vector.broadcast %cst_27 : f32 to vector<2x128xf32>
    %118 = arith.addf %116, %117 : vector<2x128xf32>
    %119 = vector.extract_strided_slice %118 {offsets = [0, 0], sizes = [2, 32], strides = [1, 1]} : vector<2x128xf32> to vector<2x32xf32>
    %120 = vector.extract_strided_slice %118 {offsets = [0, 32], sizes = [2, 32], strides = [1, 1]} : vector<2x128xf32> to vector<2x32xf32>
    %121 = vector.extract_strided_slice %114 {offsets = [0, 64], sizes = [2, 32], strides = [1, 1]} : vector<2x128xf32> to vector<2x32xf32>
    %122 = vector.extract_strided_slice %118 {offsets = [0, 96], sizes = [2, 32], strides = [1, 1]} : vector<2x128xf32> to vector<2x32xf32>
    %123 = arith.mulf %120, %108 : vector<2x32xf32>
    %124 = arith.mulf %119, %121 : vector<2x32xf32>
    %125 = arith.addf %123, %124 : vector<2x32xf32>
    %126 = math.tanh %125 : vector<2x32xf32>
    %127 = arith.mulf %122, %126 : vector<2x32xf32>
    %128 = vector.extract_strided_slice %6 {offsets = [14, 0], sizes = [2, 128], strides = [1, 1]} : vector<16x128xf32> to vector<2x128xf32>
    %cst_28 = arith.constant dense<0.000000e+00> : vector<2x128xf32>
    %129 = tpu.matmul %127, %1, %cst_28 {dimension_numbers = #tpu.dot_dimension_numbers<[1], [0], [0], [1], [0, 0, 1, 1], [], []>} : vector<2x32xf32>, vector<32x128xf32>, vector<2x128xf32> -> vector<2x128xf32>
    %130 = arith.addf %128, %129 : vector<2x128xf32>
    %131 = math.tanh %130 : vector<2x128xf32>
    %cst_29 = arith.constant 5.000000e-01 : f32
    %132 = vector.broadcast %cst_29 : f32 to vector<2x128xf32>
    %133 = arith.mulf %132, %131 : vector<2x128xf32>
    %cst_30 = arith.constant 5.000000e-01 : f32
    %134 = vector.broadcast %cst_30 : f32 to vector<2x128xf32>
    %135 = arith.addf %133, %134 : vector<2x128xf32>
    %136 = vector.extract_strided_slice %135 {offsets = [0, 0], sizes = [2, 32], strides = [1, 1]} : vector<2x128xf32> to vector<2x32xf32>
    %137 = vector.extract_strided_slice %135 {offsets = [0, 32], sizes = [2, 32], strides = [1, 1]} : vector<2x128xf32> to vector<2x32xf32>
    %138 = vector.extract_strided_slice %131 {offsets = [0, 64], sizes = [2, 32], strides = [1, 1]} : vector<2x128xf32> to vector<2x32xf32>
    %139 = vector.extract_strided_slice %135 {offsets = [0, 96], sizes = [2, 32], strides = [1, 1]} : vector<2x128xf32> to vector<2x32xf32>
    %140 = arith.mulf %137, %125 : vector<2x32xf32>
    %141 = arith.mulf %136, %138 : vector<2x32xf32>
    %142 = arith.addf %140, %141 : vector<2x32xf32>
    %143 = math.tanh %142 : vector<2x32xf32>
    %144 = arith.mulf %139, %143 : vector<2x32xf32>
    %145 = tpu.concatenate %25, %42, %59, %76, %93, %110, %127, %144 in 1 : vector<2x32xf32>, vector<2x32xf32>, vector<2x32xf32>, vector<2x32xf32>, vector<2x32xf32>, vector<2x32xf32>, vector<2x32xf32>, vector<2x32xf32> -> vector<2x256xf32>
    %c0_31 = arith.constant 0 : index
    %c0_32 = arith.constant 0 : index
    %146 = vector.load %arg2[%c0_31, %c0_32] : memref<264x128xf32, #tpu.memory_space<vmem>>, vector<256x128xf32>
    %c256 = arith.constant 256 : index
    %c0_33 = arith.constant 0 : index
    %147 = vector.load %arg2[%c256, %c0_33] : memref<264x128xf32, #tpu.memory_space<vmem>>, vector<1x128xf32>
    %cst_34 = arith.constant dense<0.000000e+00> : vector<2x128xf32>
    %148 = tpu.matmul %145, %146, %cst_34 {dimension_numbers = #tpu.dot_dimension_numbers<[1], [0], [0], [1], [0, 0, 1, 1], [], []>} : vector<2x256xf32>, vector<256x128xf32>, vector<2x128xf32> -> vector<2x128xf32>
    %149 = vector.broadcast %147 : vector<1x128xf32> to vector<2x128xf32>
    %150 = arith.addf %148, %149 : vector<2x128xf32>
    %c0_35 = arith.constant 0 : index
    %c0_36 = arith.constant 0 : index
    %151 = vector.load %arg3[%c0_35, %c0_36] : memref<2x128xf32, #tpu.memory_space<vmem>>, vector<2x128xf32>
    tpu.vector_store %arg3[%c0_35, %c0_36], %150 {strides = array<i32>} : memref<2x128xf32, #tpu.memory_space<vmem>>, vector<2x128xf32>,
    return
  }
}

</mosaic_0001>

<llo_original>
// kernel: tpu_custom_call.1
$region0: #{tpu_custom_call.1}
  #allocation0 [shape = 'u32[]', space=smem, size = 0x4, offset = 0x4, fixed_abs, tag = 'smem constant byte address 0x4 - core index']
  #allocation1 [shape = 'u32[72,128]{1,0:T(1,128)}', space=vmem, size = 0x9000, scoped, tag = 'internal scratch']
  %s0 = inlined_call_operand.hbm [shape: f32[16,32], index: 0, kind: input, shape index: {}]
  %s1 = inlined_call_operand.hbm [shape: f32[72,128], index: 1, kind: input, shape index: {}]
  %s2 = inlined_call_operand.hbm [shape: f32[264,128], index: 2, kind: input, shape index: {}]
  %s3 = inlined_call_operand.hbm [shape: f32[2,128], index: 3, kind: output, shape index: {}]
  %s4 = sld [smem:[#allocation0]]
  $region34: #{tpu_custom_call.1} parent=0
    _
  %s6 = ssub.s32 1, %s4
  %s7 = scalar_select 0, %s6, %s4
  $region1: #{tpu_custom_call.1} parent=0
    #allocation2 [shape = 'u8[8192]{0}', space=vmem, size = 0x2000, scoped, tag = 'input window, operand 0, single buffered']
    #allocation3 [shape = 's32[1]{0}', space=sflag, size = 0x4, scoped, tag = 'scoped memory for tpu_custom_call.1']
    #allocation4 [shape = 's32[1]{0}', space=sflag, size = 0x4, scoped, tag = 'scoped memory for tpu_custom_call.1']
    #allocation5 [shape = 'u8[36864]{0}', space=vmem, size = 0x9000, scoped, tag = 'input window, operand 1, single buffered']
    #allocation6 [shape = 's32[1]{0}', space=sflag, size = 0x4, scoped, tag = 'scoped memory for tpu_custom_call.1']
    #allocation7 [shape = 'u8[135168]{0}', space=vmem, size = 0x21000, scoped, tag = 'input window, operand 2, single buffered']
    #allocation8 [shape = 'u8[1024]{0}', space=vmem, size = 0x400, scoped, tag = 'output window, operand 0, single buffered']
    %8 = vsyncpa [#allocation3], 0
    %9 = vsyncpa [#allocation6], 0
    %10 = vsyncpa [#allocation4], 0
    // Predicated region
    $region2: #{tpu_custom_call.1} parent=1 // pred_check
      _
    $region3: #{tpu_custom_call.1} parent=1 // pred_check_branch
      %12 = sbr.rel (0) target = $region5
    $region4: #{tpu_custom_call.1} parent=1 // pred_region
      %14 = vsyncadd [#allocation3], 0
      %s15 = sshll.u32 %s0, 4
      %s16 = int_to_ptr.hbm [resolvable:$true] %s15
      %s17 = sshll.u32 [#allocation2], 4
      %s18 = int_to_ptr.vmem [resolvable:$true] %s17
      %23 = dma.hbm_to_vmem [thread:$0]  %s16, 256, %s18, [#allocation3], 128, 128, 8
    $region5: #{tpu_custom_call.1} parent=1 // pred_fallthru
      _
    // Predicated region
    $region6: #{tpu_custom_call.1} parent=1 // pred_check
      _
    $region7: #{tpu_custom_call.1} parent=1 // pred_check_branch
      %25 = sbr.rel (0) target = $region9
    $region8: #{tpu_custom_call.1} parent=1 // pred_region
      %27 = vsyncadd [#allocation6], 0
      %s28 = sshll.u32 %s1, 4
      %s29 = int_to_ptr.hbm [resolvable:$true] %s28
      %s30 = sshll.u32 [#allocation5], 4
      %s31 = int_to_ptr.vmem [resolvable:$true] %s30
      %36 = dma.hbm_to_vmem [thread:$0]  %s29, 1152, %s31, [#allocation6], 128, 128, 8
    $region9: #{tpu_custom_call.1} parent=1 // pred_fallthru
      _
    // Predicated region
    $region10: #{tpu_custom_call.1} parent=1 // pred_check
      _
    $region11: #{tpu_custom_call.1} parent=1 // pred_check_branch
      %38 = sbr.rel (0) target = $region13
    $region12: #{tpu_custom_call.1} parent=1 // pred_region
      %40 = vsyncadd [#allocation6], 0
      %s41 = sshll.u32 %s2, 4
      %s42 = int_to_ptr.hbm [resolvable:$true] %s41
      %s43 = sshll.u32 [#allocation7], 4
      %s44 = int_to_ptr.vmem [resolvable:$true] %s43
      %49 = dma.hbm_to_vmem [thread:$0]  %s42, 4224, %s44, [#allocation6], 128, 128, 8
    $region13: #{tpu_custom_call.1} parent=1 // pred_fallthru
      _
    // Predicated region
    $region14: #{tpu_custom_call.1} parent=1 // pred_check
      _
    $region15: #{tpu_custom_call.1} parent=1 // pred_check_branch
      %51 = sbr.rel (0) target = $region17
    $region16: #{tpu_custom_call.1} parent=1 // pred_region
      %53 = dma.done [#allocation3], 256
    $region17: #{tpu_custom_call.1} parent=1 // pred_fallthru
      _
    // Predicated region
    $region18: #{tpu_custom_call.1} parent=1 // pred_check
      _
    $region19: #{tpu_custom_call.1} parent=1 // pred_check_branch
      %55 = sbr.rel (0) target = $region21
    $region20: #{tpu_custom_call.1} parent=1 // pred_region
      %57 = dma.done [#allocation6], 1152
    $region21: #{tpu_custom_call.1} parent=1 // pred_fallthru
      _
    // Predicated region
    $region22: #{tpu_custom_call.1} parent=1 // pred_check
      _
    $region23: #{tpu_custom_call.1} parent=1 // pred_check_branch
      %59 = sbr.rel (0) target = $region25
    $region24: #{tpu_custom_call.1} parent=1 // pred_region
      %61 = dma.done [#allocation6], 4224
    $region25: #{tpu_custom_call.1} parent=1 // pred_fallthru
      _
    %v62 = vld [vmem:[#allocation5] sm:$0xff]
    %v63 = vld [vmem:[#allocation5 + $0x8] sm:$0xff]
    %v64 = vld [vmem:[#allocation5 + $0x10] sm:$0xff]
    %v65 = vld [vmem:[#allocation5 + $0x18] sm:$0xff]
    %v66 = vld [vmem:[#allocation5 + $0x20] sm:$0xff]
    %v67 = vld [vmem:[#allocation5 + $0x28] sm:$0xff]
    %v68 = vld [vmem:[#allocation5 + $0x30] sm:$0xff]
    %v69 = vld [vmem:[#allocation5 + $0x38] sm:$0xff]
    %v70 = vld [vmem:[#allocation5 + $0x40] sm:$0x1]
    %v71 = vld [vmem:[#allocation2] sm:$0xff]
    %v72 = vld [vmem:[#allocation2 + $0x8] sm:$0xff]
    %v73 = vperm.slane %v70, 0
    %vm74 = vcmask 261120
    %v76 = vsel %vm74, %v71, 0
    %v79 = vsel %vm74, %v72, 0
    %81 = vmatpush.msra.mxu0 0.0
    %82 = vmatpush.msra.mxu0 0.0
    %83 = vmatpush.msra.mxu0 0.0
    %84 = vmatpush.msra.mxu0 0.0
    %85 = vmatpush.msra.mxu0 0.0
    %86 = vmatpush.msra.mxu0 0.0
    %87 = vmatpush.msra.mxu0 0.0
    %88 = vmatpush.msra.mxu0 0.0
    %89 = vmatpush.msra.mxu0 0.0
    %90 = vmatpush.msra.mxu0 0.0
    %91 = vmatpush.msra.mxu0 0.0
    %92 = vmatpush.msra.mxu0 0.0
    %93 = vmatpush.msra.mxu0 %v65
    %94 = vmatpush.msra.mxu0 %v64
    %95 = vmatpush.msra.mxu0 %v63
    %96 = vmatpush.msra.mxu0 %v62
    %97 = vmatmul.f32.gmra.mxu0 %v76
    %v98 = vpop.f32.mrf.mxu0
    %v99 = vadd.f32 %v73, %v98
    %100 = vmatmul.f32.gmra.mxu0 %v79
    %v101 = vpop.f32.mrf.mxu0
    %v102 = vadd.f32 %v73, %v101
    %103 = vdwg.mxu0
    %v105 = vsel %vm74, 0.0, 0
    %107 = vmatpush.msra.mxu0 0.0
    %108 = vmatpush.msra.mxu0 0.0
    %109 = vmatpush.msra.mxu0 0.0
    %110 = vmatpush.msra.mxu0 0.0
    %111 = vmatpush.msra.mxu0 0.0
    %112 = vmatpush.msra.mxu0 0.0
    %113 = vmatpush.msra.mxu0 0.0
    %114 = vmatpush.msra.mxu0 0.0
    %115 = vmatpush.msra.mxu0 0.0
    %116 = vmatpush.msra.mxu0 0.0
    %117 = vmatpush.msra.mxu0 0.0
    %118 = vmatpush.msra.mxu0 0.0
    %119 = vmatpush.msra.mxu0 %v69
    %120 = vmatpush.msra.mxu0 %v68
    %121 = vmatpush.msra.mxu0 %v67
    %122 = vmatpush.msra.mxu0 %v66
    %123 = vmatmul.f32.gmra.mxu0 %v105
    %v124 = vpop.f32.mrf.mxu0
    %v125 = vadd.f32 0.0, %v124
    %126 = vdwg.mxu0
    %v127 = vadd.f32 %v99, %v125
    %v128 = vtanh.pop %v127
    %v129 = vmul.f32 %v128, 0.5
    %v130 = vadd.f32 %v129, 0.5
    %v131 = vmul.f32 %v130, 0.0
    %133 = vrot.lane.b32.xlu0 %v128, 64
    %v134 = vpop.permute.xlu0 %133
    %v136 = vmul.f32 %v130, %v134
    %138 = vrot.lane.b32.xlu0 %v136, 32
    %v139 = vpop.permute.xlu0 %138
    %v141 = vadd.f32 %v131, %v139
    %v142 = vtanh.pop %v141
    %144 = vrot.lane.b32.xlu0 %v142, 64
    %v145 = vpop.permute.xlu0 %144
    %v147 = vmul.f32 %v130, %v145
    %149 = vrot.lane.b32.xlu0 %v147, 32
    %v150 = vpop.permute.xlu0 %149
    %v151 = vsel %vm74, %v150, 0
    %153 = vmatpush.msra.mxu0 0.0
    %154 = vmatpush.msra.mxu0 0.0
    %155 = vmatpush.msra.mxu0 0.0
    %156 = vmatpush.msra.mxu0 0.0
    %157 = vmatpush.msra.mxu0 0.0
    %158 = vmatpush.msra.mxu0 0.0
    %159 = vmatpush.msra.mxu0 0.0
    %160 = vmatpush.msra.mxu0 0.0
    %161 = vmatpush.msra.mxu0 0.0
    %162 = vmatpush.msra.mxu0 0.0
    %163 = vmatpush.msra.mxu0 0.0
    %164 = vmatpush.msra.mxu0 0.0
    %165 = vmatpush.msra.mxu0 %v69
    %166 = vmatpush.msra.mxu0 %v68
    %167 = vmatpush.msra.mxu0 %v67
    %168 = vmatpush.msra.mxu0 %v66
    %169 = vmatmul.f32.gmra.mxu0 %v151
    %v170 = vpop.f32.mrf.mxu0
    %v171 = vadd.f32 0.0, %v170
    %172 = vdwg.mxu0
    %v174 = vrot.slane %v171, 6
    %v176 = vadd.f32 %v99, %v174
    %v177 = vtanh.pop %v176
    %v178 = vmul.f32 %v177, 0.5
    %v179 = vadd.f32 %v178, 0.5
    %v181 = vrot.slane %v141, 6
    %v183 = vmul.f32 %v179, %v181
    %185 = vrot.lane.b32.xlu0 %v177, 64
    %v186 = vpop.permute.xlu0 %185
    %v188 = vmul.f32 %v179, %v186
    %190 = vrot.lane.b32.xlu0 %v188, 32
    %v191 = vpop.permute.xlu0 %190
    %v193 = vadd.f32 %v183, %v191
    %v194 = vtanh.pop %v193
    %196 = vrot.lane.b32.xlu0 %v194, 64
    %v197 = vpop.permute.xlu0 %196
    %v199 = vmul.f32 %v179, %v197
    %v201 = vrot.slane %v199, 2
    %202 = vrot.lane.b32.xlu0 %v201, 32
    %v203 = vpop.permute.xlu0 %202
    %v204 = vsel %vm74, %v203, 0
    %206 = vmatpush.msra.mxu0 0.0
    %207 = vmatpush.msra.mxu0 0.0
    %208 = vmatpush.msra.mxu0 0.0
    %209 = vmatpush.msra.mxu0 0.0
    %210 = vmatpush.msra.mxu0 0.0
    %211 = vmatpush.msra.mxu0 0.0
    %212 = vmatpush.msra.mxu0 0.0
    %213 = vmatpush.msra.mxu0 0.0
    %214 = vmatpush.msra.mxu0 0.0
    %215 = vmatpush.msra.mxu0 0.0
    %216 = vmatpush.msra.mxu0 0.0
    %217 = vmatpush.msra.mxu0 0.0
    %218 = vmatpush.msra.mxu0 %v69
    %219 = vmatpush.msra.mxu0 %v68
    %220 = vmatpush.msra.mxu0 %v67
    %221 = vmatpush.msra.mxu0 %v66
    %222 = vmatmul.f32.gmra.mxu0 %v204
    %v223 = vpop.f32.mrf.mxu0
    %v224 = vadd.f32 0.0, %v223
    %225 = vdwg.mxu0
    %v227 = vrot.slane %v224, 4
    %v229 = vadd.f32 %v99, %v227
    %v230 = vtanh.pop %v229
    %v231 = vmul.f32 %v230, 0.5
    %v232 = vadd.f32 %v231, 0.5
    %v234 = vrot.slane %v193, 6
    %v236 = vmul.f32 %v232, %v234
    %238 = vrot.lane.b32.xlu0 %v230, 64
    %v239 = vpop.permute.xlu0 %238
    %v241 = vmul.f32 %v232, %v239
    %243 = vrot.lane.b32.xlu0 %v241, 32
    %v244 = vpop.permute.xlu0 %243
    %v246 = vadd.f32 %v236, %v244
    %v247 = vtanh.pop %v246
    %249 = vrot.lane.b32.xlu0 %v247, 64
    %v250 = vpop.permute.xlu0 %249
    %v252 = vmul.f32 %v232, %v250
    %v254 = vrot.slane %v252, 4
    %255 = vrot.lane.b32.xlu0 %v254, 32
    %v256 = vpop.permute.xlu0 %255
    %v257 = vsel %vm74, %v256, 0
    %259 = vmatpush.msra.mxu0 0.0
    %260 = vmatpush.msra.mxu0 0.0
    %261 = vmatpush.msra.mxu0 0.0
    %262 = vmatpush.msra.mxu0 0.0
    %263 = vmatpush.msra.mxu0 0.0
    %264 = vmatpush.msra.mxu0 0.0
    %265 = vmatpush.msra.mxu0 0.0
    %266 = vmatpush.msra.mxu0 0.0
    %267 = vmatpush.msra.mxu0 0.0
    %268 = vmatpush.msra.mxu0 0.0
    %269 = vmatpush.msra.mxu0 0.0
    %270 = vmatpush.msra.mxu0 0.0
    %271 = vmatpush.msra.mxu0 %v69
    %272 = vmatpush.msra.mxu0 %v68
    %273 = vmatpush.msra.mxu0 %v67
    %274 = vmatpush.msra.mxu0 %v66
    %275 = vmatmul.f32.gmra.mxu0 %v257
    %v276 = vpop.f32.mrf.mxu0
    %v277 = vadd.f32 0.0, %v276
    %278 = vdwg.mxu0
    %v280 = vrot.slane %v277, 2
    %v282 = vadd.f32 %v99, %v280
    %v283 = vtanh.pop %v282
    %v284 = vmul.f32 %v283, 0.5
    %v285 = vadd.f32 %v284, 0.5
    %v287 = vrot.slane %v246, 6
    %v289 = vmul.f32 %v285, %v287
    %291 = vrot.lane.b32.xlu0 %v283, 64
    %v292 = vpop.permute.xlu0 %291
    %v294 = vmul.f32 %v285, %v292
    %296 = vrot.lane.b32.xlu0 %v294, 32
    %v297 = vpop.permute.xlu0 %296
    %v299 = vadd.f32 %v289, %v297
    %v300 = vtanh.pop %v299
    %302 = vrot.lane.b32.xlu0 %v300, 64
    %v303 = vpop.permute.xlu0 %302
    %v305 = vmul.f32 %v285, %v303
    %v307 = vrot.slane %v305, 6
    %308 = vrot.lane.b32.xlu0 %v307, 32
    %v309 = vpop.permute.xlu0 %308
    %v310 = vsel %vm74, %v309, 0
    %312 = vmatpush.msra.mxu0 0.0
    %313 = vmatpush.msra.mxu0 0.0
    %314 = vmatpush.msra.mxu0 0.0
    %315 = vmatpush.msra.mxu0 0.0
    %316 = vmatpush.msra.mxu0 0.0
    %317 = vmatpush.msra.mxu0 0.0
    %318 = vmatpush.msra.mxu0 0.0
    %319 = vmatpush.msra.mxu0 0.0
    %320 = vmatpush.msra.mxu0 0.0
    %321 = vmatpush.msra.mxu0 0.0
    %322 = vmatpush.msra.mxu0 0.0
    %323 = vmatpush.msra.mxu0 0.0
    %324 = vmatpush.msra.mxu0 %v69
    %325 = vmatpush.msra.mxu0 %v68
    %326 = vmatpush.msra.mxu0 %v67
    %327 = vmatpush.msra.mxu0 %v66
    %328 = vmatmul.f32.gmra.mxu0 %v310
    %v329 = vpop.f32.mrf.mxu0
    %v330 = vadd.f32 0.0, %v329
    %331 = vdwg.mxu0
    %v332 = vadd.f32 %v102, %v330
    %v333 = vtanh.pop %v332
    %v334 = vmul.f32 %v333, 0.5
    %v335 = vadd.f32 %v334, 0.5
    %v337 = vrot.slane %v299, 6
    %v339 = vmul.f32 %v335, %v337
    %341 = vrot.lane.b32.xlu0 %v333, 64
    %v342 = vpop.permute.xlu0 %341
    %v344 = vmul.f32 %v335, %v342
    %346 = vrot.lane.b32.xlu0 %v344, 32
    %v347 = vpop.permute.xlu0 %346
    %v349 = vadd.f32 %v339, %v347
    %v350 = vtanh.pop %v349
    %352 = vrot.lane.b32.xlu0 %v350, 64
    %v353 = vpop.permute.xlu0 %352
    %v355 = vmul.f32 %v335, %v353
    %357 = vrot.lane.b32.xlu0 %v355, 32
    %v358 = vpop.permute.xlu0 %357
    %v359 = vsel %vm74, %v358, 0
    %361 = vmatpush.msra.mxu0 0.0
    %362 = vmatpush.msra.mxu0 0.0
    %363 = vmatpush.msra.mxu0 0.0
    %364 = vmatpush.msra.mxu0 0.0
    %365 = vmatpush.msra.mxu0 0.0
    %366 = vmatpush.msra.mxu0 0.0
    %367 = vmatpush.msra.mxu0 0.0
    %368 = vmatpush.msra.mxu0 0.0
    %369 = vmatpush.msra.mxu0 0.0
    %370 = vmatpush.msra.mxu0 0.0
    %371 = vmatpush.msra.mxu0 0.0
    %372 = vmatpush.msra.mxu0 0.0
    %373 = vmatpush.msra.mxu0 %v69
    %374 = vmatpush.msra.mxu0 %v68
    %375 = vmatpush.msra.mxu0 %v67
    %376 = vmatpush.msra.mxu0 %v66
    %377 = vmatmul.f32.gmra.mxu0 %v359
    %v378 = vpop.f32.mrf.mxu0
    %v379 = vadd.f32 0.0, %v378
    %380 = vdwg.mxu0
    %v382 = vrot.slane %v379, 6
    %v384 = vadd.f32 %v102, %v382
    %v385 = vtanh.pop %v384
    %v386 = vmul.f32 %v385, 0.5
    %v387 = vadd.f32 %v386, 0.5
    %v389 = vrot.slane %v349, 6
    %v391 = vmul.f32 %v387, %v389
    %393 = vrot.lane.b32.xlu0 %v385, 64
    %v394 = vpop.permute.xlu0 %393
    %v396 = vmul.f32 %v387, %v394
    %398 = vrot.lane.b32.xlu0 %v396, 32
    %v399 = vpop.permute.xlu0 %398
    %v401 = vadd.f32 %v391, %v399
    %v402 = vtanh.pop %v401
    %404 = vrot.lane.b32.xlu0 %v402, 64
    %v405 = vpop.permute.xlu0 %404
    %v407 = vmul.f32 %v387, %v405
    %v409 = vrot.slane %v407, 2
    %410 = vrot.lane.b32.xlu0 %v409, 32
    %v411 = vpop.permute.xlu0 %410
    %v412 = vsel %vm74, %v411, 0
    %414 = vmatpush.msra.mxu0 0.0
    %415 = vmatpush.msra.mxu0 0.0
    %416 = vmatpush.msra.mxu0 0.0
    %417 = vmatpush.msra.mxu0 0.0
    %418 = vmatpush.msra.mxu0 0.0
    %419 = vmatpush.msra.mxu0 0.0
    %420 = vmatpush.msra.mxu0 0.0
    %421 = vmatpush.msra.mxu0 0.0
    %422 = vmatpush.msra.mxu0 0.0
    %423 = vmatpush.msra.mxu0 0.0
    %424 = vmatpush.msra.mxu0 0.0
    %425 = vmatpush.msra.mxu0 0.0
    %426 = vmatpush.msra.mxu0 %v69
    %427 = vmatpush.msra.mxu0 %v68
    %428 = vmatpush.msra.mxu0 %v67
    %429 = vmatpush.msra.mxu0 %v66
    %430 = vmatmul.f32.gmra.mxu0 %v412
    %v431 = vpop.f32.mrf.mxu0
    %v432 = vadd.f32 0.0, %v431
    %433 = vdwg.mxu0
    %v435 = vrot.slane %v432, 4
    %v437 = vadd.f32 %v102, %v435
    %v438 = vtanh.pop %v437
    %v439 = vmul.f32 %v438, 0.5
    %v440 = vadd.f32 %v439, 0.5
    %v442 = vrot.slane %v401, 6
    %v444 = vmul.f32 %v440, %v442
    %446 = vrot.lane.b32.xlu0 %v438, 64
    %v447 = vpop.permute.xlu0 %446
    %v449 = vmul.f32 %v440, %v447
    %451 = vrot.lane.b32.xlu0 %v449, 32
    %v452 = vpop.permute.xlu0 %451
    %v454 = vadd.f32 %v444, %v452
    %v455 = vtanh.pop %v454
    %457 = vrot.lane.b32.xlu0 %v455, 64
    %v458 = vpop.permute.xlu0 %457
    %v460 = vmul.f32 %v440, %v458
    %v462 = vrot.slane %v460, 4
    %463 = vrot.lane.b32.xlu0 %v462, 32
    %v464 = vpop.permute.xlu0 %463
    %v465 = vsel %vm74, %v464, 0
    %467 = vmatpush.msra.mxu0 0.0
    %468 = vmatpush.msra.mxu0 0.0
    %469 = vmatpush.msra.mxu0 0.0
    %470 = vmatpush.msra.mxu0 0.0
    %471 = vmatpush.msra.mxu0 0.0
    %472 = vmatpush.msra.mxu0 0.0
    %473 = vmatpush.msra.mxu0 0.0
    %474 = vmatpush.msra.mxu0 0.0
    %475 = vmatpush.msra.mxu0 0.0
    %476 = vmatpush.msra.mxu0 0.0
    %477 = vmatpush.msra.mxu0 0.0
    %478 = vmatpush.msra.mxu0 0.0
    %479 = vmatpush.msra.mxu0 %v69
    %480 = vmatpush.msra.mxu0 %v68
    %481 = vmatpush.msra.mxu0 %v67
    %482 = vmatpush.msra.mxu0 %v66
    %483 = vmatmul.f32.gmra.mxu0 %v465
    %v484 = vpop.f32.mrf.mxu0
    %v485 = vadd.f32 0.0, %v484
    %486 = vdwg.mxu0
    %v488 = vrot.slane %v485, 2
    %v490 = vadd.f32 %v102, %v488
    %v491 = vtanh.pop %v490
    %v492 = vmul.f32 %v491, 0.5
    %v493 = vadd.f32 %v492, 0.5
    %v495 = vrot.slane %v454, 6
    %v497 = vmul.f32 %v493, %v495
    %499 = vrot.lane.b32.xlu0 %v491, 64
    %v500 = vpop.permute.xlu0 %499
    %v502 = vmul.f32 %v493, %v500
    %504 = vrot.lane.b32.xlu0 %v502, 32
    %v505 = vpop.permute.xlu0 %504
    %v507 = vadd.f32 %v497, %v505
    %v508 = vtanh.pop %v507
    %510 = vrot.lane.b32.xlu0 %v508, 64
    %v511 = vpop.permute.xlu0 %510
    %v513 = vmul.f32 %v493, %v511
    %515 = vrot.lane.b32.xlu0 %v201, 64
    %v516 = vpop.permute.xlu0 %515
    %518 = vrot.lane.b32.xlu0 %v254, 96
    %v519 = vpop.permute.xlu0 %518
    %523 = vrot.lane.b32.xlu0 %v409, 64
    %v524 = vpop.permute.xlu0 %523
    %526 = vrot.lane.b32.xlu0 %v462, 96
    %v527 = vpop.permute.xlu0 %526
    %v530 = vrot.slane %v513, 6
    %v532 = vsel %vm74, %v150, %v516
    %vm533 = vcmask 523264
    %v534 = vsel %vm533, %v532, %v519
    %vm535 = vcmask 785408
    %v536 = vsel %vm535, %v534, %v307
    %v537 = vsel %vm74, %v358, %v524
    %v538 = vsel %vm533, %v537, %v527
    %v539 = vsel %vm535, %v538, %v530
    %v540 = vld [vmem:[#allocation7] sm:$0xff]
    %v541 = vld [vmem:[#allocation7 + $0x8] sm:$0xff]
    %v542 = vld [vmem:[#allocation7 + $0x10] sm:$0xff]
    %v543 = vld [vmem:[#allocation7 + $0x18] sm:$0xff]
    %v544 = vld [vmem:[#allocation7 + $0x20] sm:$0xff]
    %v545 = vld [vmem:[#allocation7 + $0x28] sm:$0xff]
    %v546 = vld [vmem:[#allocation7 + $0x30] sm:$0xff]
    %v547 = vld [vmem:[#allocation7 + $0x38] sm:$0xff]
    %v548 = vld [vmem:[#allocation7 + $0x40] sm:$0xff]
    %v549 = vld [vmem:[#allocation7 + $0x48] sm:$0xff]
    %v550 = vld [vmem:[#allocation7 + $0x50] sm:$0xff]
    %v551 = vld [vmem:[#allocation7 + $0x58] sm:$0xff]
    %v552 = vld [vmem:[#allocation7 + $0x60] sm:$0xff]
    %v553 = vld [vmem:[#allocation7 + $0x68] sm:$0xff]
    %v554 = vld [vmem:[#allocation7 + $0x70] sm:$0xff]
    %v555 = vld [vmem:[#allocation7 + $0x78] sm:$0xff]
    %v556 = vld [vmem:[#allocation7 + $0x80] sm:$0xff]
    %v557 = vld [vmem:[#allocation7 + $0x88] sm:$0xff]
    %v558 = vld [vmem:[#allocation7 + $0x90] sm:$0xff]
    %v559 = vld [vmem:[#allocation7 + $0x98] sm:$0xff]
    %v560 = vld [vmem:[#allocation7 + $0xa0] sm:$0xff]
    %v561 = vld [vmem:[#allocation7 + $0xa8] sm:$0xff]
    %v562 = vld [vmem:[#allocation7 + $0xb0] sm:$0xff]
    %v563 = vld [vmem:[#allocation7 + $0xb8] sm:$0xff]
    %v564 = vld [vmem:[#allocation7 + $0xc0] sm:$0xff]
    %v565 = vld [vmem:[#allocation7 + $0xc8] sm:$0xff]
    %v566 = vld [vmem:[#allocation7 + $0xd0] sm:$0xff]
    %v567 = vld [vmem:[#allocation7 + $0xd8] sm:$0xff]
    %v568 = vld [vmem:[#allocation7 + $0xe0] sm:$0xff]
    %v569 = vld [vmem:[#allocation7 + $0xe8] sm:$0xff]
    %v570 = vld [vmem:[#allocation7 + $0xf0] sm:$0xff]
    %v571 = vld [vmem:[#allocation7 + $0xf8] sm:$0xff]
    %v572 = vld [vmem:[#allocation7 + $0x100] sm:$0x1]
    %v573 = vperm.slane %v572, 0
    %574 = vmatpush.msra.mxu0 %v555
    %575 = vmatpush.msra.mxu0 %v554
    %576 = vmatpush.msra.mxu0 %v553
    %577 = vmatpush.msra.mxu0 %v552
    %578 = vmatpush.msra.mxu0 %v551
    %579 = vmatpush.msra.mxu0 %v550
    %580 = vmatpush.msra.mxu0 %v549
    %581 = vmatpush.msra.mxu0 %v548
    %582 = vmatpush.msra.mxu0 %v547
    %583 = vmatpush.msra.mxu0 %v546
    %584 = vmatpush.msra.mxu0 %v545
    %585 = vmatpush.msra.mxu0 %v544
    %586 = vmatpush.msra.mxu0 %v543
    %587 = vmatpush.msra.mxu0 %v542
    %588 = vmatpush.msra.mxu0 %v541
    %589 = vmatpush.msra.mxu0 %v540
    %590 = vmatmul.f32.gmra.mxu0 %v536
    %v591 = vpop.f32.mrf.mxu0
    %v592 = vadd.f32 %v573, %v591
    %593 = vdwg.mxu0
    %594 = vmatpush.msra.mxu0 %v571
    %595 = vmatpush.msra.mxu0 %v570
    %596 = vmatpush.msra.mxu0 %v569
    %597 = vmatpush.msra.mxu0 %v568
    %598 = vmatpush.msra.mxu0 %v567
    %599 = vmatpush.msra.mxu0 %v566
    %600 = vmatpush.msra.mxu0 %v565
    %601 = vmatpush.msra.mxu0 %v564
    %602 = vmatpush.msra.mxu0 %v563
    %603 = vmatpush.msra.mxu0 %v562
    %604 = vmatpush.msra.mxu0 %v561
    %605 = vmatpush.msra.mxu0 %v560
    %606 = vmatpush.msra.mxu0 %v559
    %607 = vmatpush.msra.mxu0 %v558
    %608 = vmatpush.msra.mxu0 %v557
    %609 = vmatpush.msra.mxu0 %v556
    %610 = vmatmul.f32.gmra.mxu0 %v539
    %v611 = vpop.f32.mrf.mxu0
    %v612 = vadd.f32 %v592, %v611
    %613 = vdwg.mxu0
    %614 = vst [vmem:[#allocation8] sm:$0x3] %v612
    // Predicated region
    $region26: #{tpu_custom_call.1} parent=1 // pred_check
      _
    $region27: #{tpu_custom_call.1} parent=1 // pred_check_branch
      %616 = sbr.rel (0) target = $region29
    $region28: #{tpu_custom_call.1} parent=1 // pred_region
      %618 = vsyncadd [#allocation4], 0
      %s620 = sshll.u32 [#allocation8], 4
      %s621 = int_to_ptr.vmem [resolvable:$true] %s620
      %s622 = sshll.u32 %s3, 4
      %s623 = int_to_ptr.hbm [resolvable:$true] %s622
      %625 = dma.vmem_to_hbm [thread:$0]  %s621, 32, %s623, [#allocation4]
    $region29: #{tpu_custom_call.1} parent=1 // pred_fallthru
      _
    // Predicated region
    $region30: #{tpu_custom_call.1} parent=1 // pred_check
      _
    $region31: #{tpu_custom_call.1} parent=1 // pred_check_branch
      %627 = sbr.rel (0) target = $region33
    $region32: #{tpu_custom_call.1} parent=1 // pred_region
      %629 = dma.done [#allocation4], 32
    $region33: #{tpu_custom_call.1} parent=1 // pred_fallthru
      _
    %630 = vsyncpa [#allocation3], 1
    %631 = vsyncpa [#allocation6], 1
    %632 = vsyncpa [#allocation4], 1

</llo_original>
